<compile_context>
chip_gen: v7x
topology: tpu7x:2x2x1
jax: 0.10.0
libtpu: 0.0.40
codegen_flags: <defaults>
</compile_context>

<pallas_src>
import functools
import math

import jax
import jax.numpy as jnp
from jax import lax
from jax.experimental import pallas as pl
from jax.experimental.pallas import tpu as pltpu


@functools.lru_cache(maxsize=None)
def _vmem_limit_bytes():
    """Scoped-VMEM limit with headroom (v7x has only 64 MiB physical per TC)."""
    try:
        cap = int(pltpu.get_tpu_info().vmem_capacity_bytes)
    except Exception:  # pragma: no cover - info query unavailable
        cap = 64 * 1024 * 1024
    # Leave >= 25% headroom for Mosaic internal scratch and double-buffering.
    return int(min(cap * 3 // 4, 96 * 1024 * 1024))


def _pick_tile(dim, target, align):
    """Largest `align`-multiple divisor of `dim` <= target, else full `dim`.

    Guarantees the chosen tile either equals the full dim or is a multiple of
    `align`, so the (8, 128) layout constraint on the last two block dims holds.
    """
    if dim <= target:
        return dim
    t = (target // align) * align
    while t >= align:
        if dim % t == 0:
            return t
        t -= align
    return dim


# ----------------------------- tiled linear ---------------------------------


def _linear_kernel(x_ref, w_ref, b_ref, o_ref, acc_ref):
    @pl.when(pl.program_id(2) == 0)
    def _():
        acc_ref[...] = jnp.zeros_like(acc_ref)

    # bf16 x bf16 -> f32 accumulation (full bf16 MXU rate).
    acc_ref[...] += jnp.dot(
        x_ref[...], w_ref[...], preferred_element_type=jnp.float32
    )

    @pl.when(pl.program_id(2) == pl.num_programs(2) - 1)
    def _():
        o_ref[...] = (acc_ref[...] + b_ref[...]).astype(o_ref.dtype)


def pallas_linear(x2d, w_t, b, out_dtype=jnp.float32):
    """y = x2d @ w_t + b  (nn.Linear with w_t = W.T), tiled + pipelined.

    x2d / w_t are expected in bf16; the bias stays f32 and is added to the f32
    accumulator in the finalize step.
    """
    M, K = x2d.shape
    K2, N = w_t.shape
    assert K == K2
    # bf16 operands -> 512-target tiles double-buffered are only a few MiB.
    tm = _pick_tile(M, 512, 8)
    tn = _pick_tile(N, 512, 128)
    tk = _pick_tile(K, 512, 128)
    grid = (M // tm, N // tn, K // tk)
    cost = pl.CostEstimate(
        flops=2 * M * N * K,
        transcendentals=0,
        bytes_accessed=2 * (M * K + K * N) + 4 * (M * N + N),
    )
    return pl.pallas_call(
        _linear_kernel,
        out_shape=jax.ShapeDtypeStruct((M, N), out_dtype),
        grid=grid,
        in_specs=[
            pl.BlockSpec((tm, tk), lambda i, j, k: (i, k)),
            pl.BlockSpec((tk, tn), lambda i, j, k: (k, j)),
            pl.BlockSpec((1, tn), lambda i, j, k: (0, j)),
        ],
        out_specs=pl.BlockSpec((tm, tn), lambda i, j, k: (i, j)),
        scratch_shapes=[pltpu.VMEM((tm, tn), jnp.float32)],
        compiler_params=pltpu.CompilerParams(
            dimension_semantics=("parallel", "parallel", "arbitrary"),
            vmem_limit_bytes=_vmem_limit_bytes(),
        ),
        cost_estimate=cost,
    )(x2d, w_t, b.reshape(1, N))


# -------------------------- flash attention core -----------------------------


def _flash_attn_kernel(*refs, mask_kind):
    if mask_kind == "none":
        q_ref, k_ref, v_ref, o_ref, m_sc, l_sc, acc_sc = refs
        mask_ref = None
    else:
        q_ref, k_ref, v_ref, mask_ref, o_ref, m_sc, l_sc, acc_sc = refs

    kj = pl.program_id(3)

    @pl.when(kj == 0)
    def _():
        m_sc[...] = jnp.full_like(m_sc, -jnp.inf)
        l_sc[...] = jnp.zeros_like(l_sc)
        acc_sc[...] = jnp.zeros_like(acc_sc)

    # 1/sqrt(d_k) is pre-folded into the Q projection, so no rescale here.
    # Contract last axes of q and k directly (no in-kernel k.T relayout);
    # bf16 operands, f32 accumulation.
    s = lax.dot_general(
        q_ref[...], k_ref[...], (((1,), (1,)), ((), ())),
        preferred_element_type=jnp.float32,
    )
    if mask_ref is not None:
        # masked_fill(mask == 0, -1e9): (1, tkv) key-padding mask broadcasts
        # over the query rows; a full (tq, tkv) mask applies elementwise.
        s = jnp.where(mask_ref[...] == 0.0, jnp.float32(-1e9), s)

    # Online (flash) softmax update — all statistics kept in f32.
    m_prev = m_sc[...]
    m_new = jnp.maximum(m_prev, jnp.max(s, axis=-1, keepdims=True))
    alpha = jnp.exp(m_prev - m_new)
    p = jnp.exp(s - m_new)
    l_sc[...] = alpha * l_sc[...] + jnp.sum(p, axis=-1, keepdims=True)
    acc_sc[...] = alpha * acc_sc[...] + jnp.dot(
        p.astype(v_ref.dtype), v_ref[...], preferred_element_type=jnp.float32
    )
    m_sc[...] = m_new

    @pl.when(kj == pl.num_programs(3) - 1)
    def _():
        inv_l = pl.reciprocal(l_sc[...], approx=True)  # EUP slot, ~free
        o_ref[...] = (acc_sc[...] * inv_l).astype(o_ref.dtype)


def pallas_flash_attention(q_arr, q_slot, k_arr, k_slot, v_arr, v_slot,
                           mask=None, mask_kind="none"):
    """Flash attention reading q/k/v from stacked (slots, B, H, S, d_k) bf16.

    The qkv slot and the head are selected purely in the index_map, so no
    per-tensor slicing/transposition of the activations is required.
    Returns bf16 (B, H, Sq, d_k).
    """
    _, B, H, Sq, d_k = q_arr.shape
    Sk = k_arr.shape[3]
    tq = _pick_tile(Sq, 256, 8)
    tkv = _pick_tile(Sk, 512, 128)   # larger kv steps now that mask DMA is gone
    grid = (B, H, Sq // tq, Sk // tkv)

    q_spec = pl.BlockSpec(
        (None, None, None, tq, d_k),
        lambda b, hh, qi, kj: (q_slot, b, hh, qi, 0),
    )
    k_spec = pl.BlockSpec(
        (None, None, None, tkv, d_k),
        lambda b, hh, qi, kj: (k_slot, b, hh, kj, 0),
    )
    v_spec = pl.BlockSpec(
        (None, None, None, tkv, d_k),
        lambda b, hh, qi, kj: (v_slot, b, hh, kj, 0),
    )
    in_specs = [q_spec, k_spec, v_spec]
    args = [q_arr, k_arr, v_arr]

    mask_bytes = 0
    if mask_kind == "kv":
        # Compact key-padding mask (B, 1, Sk): only a (1, tkv) lane block per
        # kv step instead of a materialized (B, Sq, Sk) bias stream.
        in_specs.append(
            pl.BlockSpec((None, 1, tkv), lambda b, hh, qi, kj: (b, 0, kj))
        )
        args.append(mask)
        mask_bytes = 4 * B * Sk
    elif mask_kind == "full":
        in_specs.append(
            pl.BlockSpec((None, tq, tkv), lambda b, hh, qi, kj: (b, qi, kj))
        )
        args.append(mask)
        mask_bytes = 4 * B * Sq * Sk

    out_spec = pl.BlockSpec(
        (None, None, tq, d_k), lambda b, hh, qi, kj: (b, hh, qi, 0)
    )

    kernel = functools.partial(_flash_attn_kernel, mask_kind=mask_kind)
    cost = pl.CostEstimate(
        flops=4 * B * H * Sq * Sk * d_k,
        transcendentals=B * H * Sq * Sk,
        bytes_accessed=2 * B * H * (2 * Sq * d_k + 2 * Sk * d_k) + mask_bytes,
    )

    return pl.pallas_call(
        kernel,
        out_shape=jax.ShapeDtypeStruct((B, H, Sq, d_k), jnp.bfloat16),
        grid=grid,
        in_specs=in_specs,
        out_specs=out_spec,
        scratch_shapes=[
            pltpu.VMEM((tq, 1), jnp.float32),    # running max
            pltpu.VMEM((tq, 1), jnp.float32),    # running sum
            pltpu.VMEM((tq, d_k), jnp.float32),  # output accumulator
        ],
        compiler_params=pltpu.CompilerParams(
            dimension_semantics=("parallel", "parallel", "parallel", "arbitrary"),
            vmem_limit_bytes=_vmem_limit_bytes(),
        ),
        cost_estimate=cost,
    )(*args)


# ------------------------------ module glue ---------------------------------


def init_params(key, d_model):
    """4 x nn.Linear(d_model, d_model): weight (out, in), bias (out,)."""
    keys = jax.random.split(key, 8)
    params = []
    scale = 1.0 / math.sqrt(d_model)
    for i in range(4):
        w = jax.random.normal(keys[2 * i], (d_model, d_model), jnp.float32) * scale
        b = jax.random.normal(keys[2 * i + 1], (d_model,), jnp.float32) * 0.01
        params.append((w, b))
    return params


def multi_headed_attention(params, h, query, key, value, mask=None):
    B, Sq, D = query.shape
    Sk = key.shape[1]
    d_k = D // h
    (wq, bq), (wk, bk), (wv, bv), (wo, bo) = params

    # Fold 1/sqrt(d_k) into the Q projection weights & bias at trace time.
    sm_scale = jnp.float32(1.0 / math.sqrt(d_k))
    wq_t = (wq.T * sm_scale).astype(jnp.bfloat16)
    bq_s = bq * sm_scale
    wk_t = wk.T.astype(jnp.bfloat16)
    wv_t = wv.T.astype(jnp.bfloat16)

    q_in = query.reshape(B * Sq, D).astype(jnp.bfloat16)

    if (query is key) and (key is value):
        # Self-attention: fused QKV projection -> one pass over the activations.
        w_qkv = jnp.concatenate([wq_t, wk_t, wv_t], axis=1)   # (D, 3D) bf16
        b_qkv = jnp.concatenate([bq_s, bk, bv])                # (3D,)  f32
        qkv = pallas_linear(q_in, w_qkv, b_qkv, out_dtype=jnp.bfloat16)
        # One bf16 transpose of the stacked tensor instead of three.
        qkv = qkv.reshape(B, Sq, 3, h, d_k).transpose(2, 0, 3, 1, 4)
        q_arr, q_slot = qkv, 0
        k_arr, k_slot = qkv, 1
        v_arr, v_slot = qkv, 2
    else:
        q2 = pallas_linear(q_in, wq_t, bq_s, out_dtype=jnp.bfloat16)
        q_arr = q2.reshape(B, Sq, 1, h, d_k).transpose(2, 0, 3, 1, 4)
        q_slot = 0
        kv_in = key.reshape(B * Sk, D).astype(jnp.bfloat16)
        if key is value:
            # Cross-attention with shared memory: fuse the K/V projections.
            w_kv = jnp.concatenate([wk_t, wv_t], axis=1)
            b_kv = jnp.concatenate([bk, bv])
            kv = pallas_linear(kv_in, w_kv, b_kv, out_dtype=jnp.bfloat16)
            kv = kv.reshape(B, Sk, 2, h, d_k).transpose(2, 0, 3, 1, 4)
            k_arr, k_slot = kv, 0
            v_arr, v_slot = kv, 1
        else:
            v_in = value.reshape(B * Sk, D).astype(jnp.bfloat16)
            k2 = pallas_linear(kv_in, wk_t, bk, out_dtype=jnp.bfloat16)
            v2 = pallas_linear(v_in, wv_t, bv, out_dtype=jnp.bfloat16)
            k_arr = k2.reshape(B, Sk, 1, h, d_k).transpose(2, 0, 3, 1, 4)
            v_arr = v2.reshape(B, Sk, 1, h, d_k).transpose(2, 0, 3, 1, 4)
            k_slot, v_slot = 0, 0

    # mask.unsqueeze(1) semantics (broadcast over heads).  Key-padding masks
    # stay compact (B, 1, Sk) and are applied in-register inside the flash
    # kernel; only a genuinely 2-D-per-query mask falls back to (B, Sq, Sk).
    mask_arr, mask_kind = None, "none"
    if mask is not None:
        m = jnp.asarray(mask)
        if m.ndim == 2:
            m = m[:, None, :]
        if m.shape[1] == 1:
            mask_arr = m.astype(jnp.float32)                       # (B, 1, Sk)
            mask_kind = "kv"
        else:
            mask_arr = jnp.broadcast_to(m, (B, Sq, Sk)).astype(jnp.float32)
            mask_kind = "full"

    x = pallas_flash_attention(q_arr, q_slot, k_arr, k_slot, v_arr, v_slot,
                               mask=mask_arr, mask_kind=mask_kind)

    # Head merge: one cheap bf16 transpose, then a full-K tiled linear for the
    # output projection (full MXU fill, lane-dense loads) instead of a d_k-deep
    # per-head reduction.
    x2d = x.transpose(0, 2, 1, 3).reshape(B * Sq, D)
    y = pallas_linear(x2d, wo.T.astype(jnp.bfloat16), bo, out_dtype=jnp.float32)
    return y.reshape(B, Sq, D)


# -------------------------- pure-JAX reference -------------------------------


def reference(params, h, query, key, value, mask=None):
    B, Sq, D = query.shape
    Sk = key.shape[1]
    d_k = D // h
    (wq, bq), (wk, bk), (wv, bv), (wo, bo) = params
    q = (query @ wq.T + bq).reshape(B, Sq, h, d_k).transpose(0, 2, 1, 3)
    k = (key @ wk.T + bk).reshape(B, Sk, h, d_k).transpose(0, 2, 1, 3)
    v = (value @ wv.T + bv).reshape(B, Sk, h, d_k).transpose(0, 2, 1, 3)
    scores = jnp.einsum("bhqd,bhkd->bhqk", q, k) / math.sqrt(d_k)
    if mask is not None:
        m = jnp.asarray(mask)
        if m.ndim == 2:
            m = m[:, None, :]
        scores = jnp.where(m[:, None] == 0, -1e9, scores)
    p = jax.nn.softmax(scores, axis=-1)
    x = jnp.einsum("bhqk,bhkd->bhqd", p, v)
    x = x.transpose(0, 2, 1, 3).reshape(B, Sq, D)
    return x @ wo.T + bo


# --------------------------------- main --------------------------------------

if __name__ == "__main__":
    B, S, h, d_model = 2, 8, 4, 32
    root = jax.random.PRNGKey(0)
    kx, km, kp, kq2 = jax.random.split(root, 4)
    x = jax.random.normal(kx, (B, S, d_model), jnp.float32)
    params = init_params(kp, d_model)

    # bf16 matmul operands (f32 accumulation) -> compare with bf16 tolerances.
    ATOL, RTOL = 5e-2, 5e-2

    # 1) self-attention, no mask (fused QKV + no-mask flash path)
    out = jax.block_until_ready(multi_headed_attention(params, h, x, x, x))
    ref = reference(params, h, x, x, x)
    assert out.shape == (B, S, d_model), out.shape
    assert jnp.allclose(out, ref, atol=ATOL, rtol=RTOL), "self-attn mismatch"

    # 2) self-attention with a key-padding mask (compact in-kernel mask path)
    mask = jnp.ones((B, 1, S), jnp.float32).at[:, :, S - 2 :].set(0.0)
    out_m = jax.block_until_ready(
        multi_headed_attention(params, h, x, x, x, mask=mask)
    )
    ref_m = reference(params, h, x, x, x, mask=mask)
    assert jnp.allclose(out_m, ref_m, atol=ATOL, rtol=RTOL), "masked mismatch"

    # 3) cross-attention (separate query, shared key/value memory)
    q_in = jax.random.normal(kq2, (B, S, d_model), jnp.float32)
    mem = jax.random.normal(km, (B, S, d_model), jnp.float32)
    out_c = jax.block_until_ready(
        multi_headed_attention(params, h, q_in, mem, mem)
    )
    ref_c = reference(params, h, q_in, mem, mem)
    assert jnp.allclose(out_c, ref_c, atol=ATOL, rtol=RTOL), "cross-attn mismatch"

    print("KERNEL_OK")
</pallas_src>

<mosaic_0001>
module attributes {stable_mosaic.version = 11 : i64} {
  func.func @_linear_kernel(%arg0: i32, %arg1: i32, %arg2: i32, %arg3: memref<16x32xbf16, #tpu.memory_space<vmem>>, %arg4: memref<32x96xbf16, #tpu.memory_space<vmem>>, %arg5: memref<1x96xf32, #tpu.memory_space<vmem>>, %arg6: memref<16x96xbf16, #tpu.memory_space<vmem>>, %arg7: memref<16x96xf32, #tpu.memory_space<vmem>>) attributes {dimension_semantics = [#tpu.dimension_semantics<parallel>, #tpu.dimension_semantics<parallel>, #tpu.dimension_semantics<arbitrary>], iteration_bounds = array<i64: 1, 1, 1>, scalar_prefetch = 0 : i64, scratch_operands = 1 : i64, tpu.core_type = #tpu.core_type<tc>, window_params = [{transform_indices = @transform_0, window_bounds = array<i64: 16, 32>}, {transform_indices = @transform_1, window_bounds = array<i64: 32, 96>}, {transform_indices = @transform_2, window_bounds = array<i64: 1, 96>}, {transform_indices = @transform_3, window_bounds = array<i64: 16, 96>}]} {
    %c0_i32 = arith.constant 0 : i32
    %0 = arith.cmpi eq, %arg2, %c0_i32 : i32
    %1 = arith.extui %0 : i1 to i32
    %c0_i32_0 = arith.constant 0 : i32
    %2 = arith.cmpi ne, %1, %c0_i32_0 : i32
    scf.if %2 {
      %cst_10 = arith.constant 0.000000e+00 : f32
      %12 = vector.broadcast %cst_10 : f32 to vector<16x96xf32>
      %c0_11 = arith.constant 0 : index
      %c0_12 = arith.constant 0 : index
      %13 = vector.load %arg7[%c0_11, %c0_12] : memref<16x96xf32, #tpu.memory_space<vmem>>, vector<16x96xf32>
      tpu.vector_store %arg7[%c0_11, %c0_12], %12 {strides = array<i32>} : memref<16x96xf32, #tpu.memory_space<vmem>>, vector<16x96xf32>,
    } else {
    }
    %c0 = arith.constant 0 : index
    %c0_1 = arith.constant 0 : index
    %3 = vector.load %arg7[%c0, %c0_1] : memref<16x96xf32, #tpu.memory_space<vmem>>, vector<16x96xf32>
    %c0_2 = arith.constant 0 : index
    %c0_3 = arith.constant 0 : index
    %4 = vector.load %arg3[%c0_2, %c0_3] : memref<16x32xbf16, #tpu.memory_space<vmem>>, vector<16x32xbf16>
    %c0_4 = arith.constant 0 : index
    %c0_5 = arith.constant 0 : index
    %5 = vector.load %arg4[%c0_4, %c0_5] : memref<32x96xbf16, #tpu.memory_space<vmem>>, vector<32x96xbf16>
    %cst = arith.constant dense<0.000000e+00> : vector<16x96xf32>
    %6 = tpu.matmul %4, %5, %cst {dimension_numbers = #tpu.dot_dimension_numbers<[1], [0], [0], [1], [0, 0, 1, 1], [], []>} : vector<16x32xbf16>, vector<32x96xbf16>, vector<16x96xf32> -> vector<16x96xf32>
    %7 = arith.addf %3, %6 : vector<16x96xf32>
    %c0_6 = arith.constant 0 : index
    %c0_7 = arith.constant 0 : index
    %8 = vector.load %arg7[%c0_6, %c0_7] : memref<16x96xf32, #tpu.memory_space<vmem>>, vector<16x96xf32>
    tpu.vector_store %arg7[%c0_6, %c0_7], %7 {strides = array<i32>} : memref<16x96xf32, #tpu.memory_space<vmem>>, vector<16x96xf32>,
    %c0_i32_8 = arith.constant 0 : i32
    %9 = arith.cmpi eq, %arg2, %c0_i32_8 : i32
    %10 = arith.extui %9 : i1 to i32
    %c0_i32_9 = arith.constant 0 : i32
    %11 = arith.cmpi ne, %10, %c0_i32_9 : i32
    scf.if %11 {
      %c0_10 = arith.constant 0 : index
      %c0_11 = arith.constant 0 : index
      %12 = vector.load %arg7[%c0_10, %c0_11] : memref<16x96xf32, #tpu.memory_space<vmem>>, vector<16x96xf32>
      %c0_12 = arith.constant 0 : index
      %c0_13 = arith.constant 0 : index
      %13 = vector.load %arg5[%c0_12, %c0_13] : memref<1x96xf32, #tpu.memory_space<vmem>>, vector<1x96xf32>
      %14 = vector.broadcast %13 : vector<1x96xf32> to vector<16x96xf32>
      %15 = arith.addf %12, %14 : vector<16x96xf32>
      %16 = arith.truncf %15 : vector<16x96xf32> to vector<16x96xbf16>
      %c0_14 = arith.constant 0 : index
      %c0_15 = arith.constant 0 : index
      %17 = vector.load %arg6[%c0_14, %c0_15] : memref<16x96xbf16, #tpu.memory_space<vmem>>, vector<16x96xbf16>
      tpu.vector_store %arg6[%c0_14, %c0_15], %16 {strides = array<i32>} : memref<16x96xbf16, #tpu.memory_space<vmem>>, vector<16x96xbf16>,
    } else {
    }
    return
  }
  func.func @transform_0(%arg0: i32, %arg1: i32, %arg2: i32) -> (i32, i32) {
    %c0_i32 = arith.constant 0 : i32
    return %arg0, %arg2 : i32, i32
  }
  func.func @transform_1(%arg0: i32, %arg1: i32, %arg2: i32) -> (i32, i32) {
    %c0_i32 = arith.constant 0 : i32
    return %arg2, %arg1 : i32, i32
  }
  func.func @transform_2(%arg0: i32, %arg1: i32, %arg2: i32) -> (i32, i32) {
    %c0_i32 = arith.constant 0 : i32
    %c0_i32_0 = arith.constant 0 : i32
    return %c0_i32, %arg1 : i32, i32
  }
  func.func @transform_3(%arg0: i32, %arg1: i32, %arg2: i32) -> (i32, i32) {
    %c0_i32 = arith.constant 0 : i32
    return %arg0, %arg1 : i32, i32
  }
}

</mosaic_0001>

<llo_original>
// kernel: tpu_custom_call.1
$region0: #{tpu_custom_call.1}
  #allocation0 [shape = 'u32[]', space=smem, size = 0x4, offset = 0x4, fixed_abs, tag = 'smem constant byte address 0x4 - core index']
  #allocation1 [shape = 'u32[144,128]{1,0:T(1,128)}', space=vmem, size = 0x12000, scoped, tag = 'internal scratch']
  #allocation2 [shape = 'f32[16,96]{1,0:T(8,128)}', space=vmem, size = 0x2000, scoped, tag = 'scratch operand']
  %s0 = inlined_call_operand.hbm [shape: bf16[16,32], index: 0, kind: input, shape index: {}]
  %s1 = inlined_call_operand.hbm [shape: bf16[32,96], index: 1, kind: input, shape index: {}]
  %s2 = inlined_call_operand.vmem [shape: f32[1,96], index: 2, kind: input, shape index: {}]
  %s3 = inlined_call_operand.hbm [shape: bf16[16,96], index: 3, kind: output, shape index: {}]
  %s4 = sld [smem:[#allocation0]]
  $region38: #{tpu_custom_call.1} parent=0
    _
  %s6 = ssub.s32 1, %s4
  %s7 = scalar_select 0, %s6, %s4
  $region1: #{tpu_custom_call.1} parent=0
    #allocation3 [shape = 'u8[4096]{0}', space=vmem, size = 0x1000, scoped, tag = 'input window, operand 0, single buffered']
    #allocation4 [shape = 's32[1]{0}', space=sflag, size = 0x4, scoped, tag = 'scoped memory for tpu_custom_call.1']
    #allocation5 [shape = 's32[1]{0}', space=sflag, size = 0x4, scoped, tag = 'scoped memory for tpu_custom_call.1']
    #allocation6 [shape = 'u8[8192]{0}', space=vmem, size = 0x2000, scoped, tag = 'input window, operand 1, single buffered']
    #allocation7 [shape = 's32[1]{0}', space=sflag, size = 0x4, scoped, tag = 'scoped memory for tpu_custom_call.1']
    #allocation8 [shape = 'u8[4096]{0}', space=vmem, size = 0x1000, scoped, tag = 'output window, operand 0, single buffered']
    %8 = vsyncpa [#allocation4], 0
    %9 = vsyncpa [#allocation7], 0
    %10 = vsyncpa [#allocation5], 0
    // Predicated region
    $region2: #{tpu_custom_call.1} parent=1 // pred_check
      _
    $region3: #{tpu_custom_call.1} parent=1 // pred_check_branch
      %12 = sbr.rel (0) target = $region5
    $region4: #{tpu_custom_call.1} parent=1 // pred_region
      %s14 = ssub.s32 128, 128
      %15 = vsyncadd [#allocation4], %s14
      %s16 = sshll.u32 [#allocation3], 4
      %s17 = int_to_ptr.vmem [resolvable:$true] %s16
      %22 = dma.hbm_to_vmem [thread:$0]  %s0, 128, %s17, [#allocation4], 64, 64, 4
    $region5: #{tpu_custom_call.1} parent=1 // pred_fallthru
      _
    // Predicated region
    $region6: #{tpu_custom_call.1} parent=1 // pred_check
      _
    $region7: #{tpu_custom_call.1} parent=1 // pred_check_branch
      %24 = sbr.rel (0) target = $region9
    $region8: #{tpu_custom_call.1} parent=1 // pred_region
      %s26 = ssub.s32 256, 256
      %27 = vsyncadd [#allocation7], %s26
      %s28 = sshll.u32 [#allocation6], 4
      %s29 = int_to_ptr.vmem [resolvable:$true] %s28
      %34 = dma.hbm_to_vmem [thread:$0]  %s1, 256, %s29, [#allocation7], 64, 64, 4
    $region9: #{tpu_custom_call.1} parent=1 // pred_fallthru
      _
    // Predicated region
    $region10: #{tpu_custom_call.1} parent=1 // pred_check
      _
    $region11: #{tpu_custom_call.1} parent=1 // pred_check_branch
      %36 = sbr.rel (0) target = $region13
    $region12: #{tpu_custom_call.1} parent=1 // pred_region
      _
    $region13: #{tpu_custom_call.1} parent=1 // pred_fallthru
      _
    // Predicated region
    $region14: #{tpu_custom_call.1} parent=1 // pred_check
      _
    $region15: #{tpu_custom_call.1} parent=1 // pred_check_branch
      %38 = sbr.rel (0) target = $region17
    $region16: #{tpu_custom_call.1} parent=1 // pred_region
      %39 = dma.done [#allocation4], 128
    $region17: #{tpu_custom_call.1} parent=1 // pred_fallthru
      _
    // Predicated region
    $region18: #{tpu_custom_call.1} parent=1 // pred_check
      _
    $region19: #{tpu_custom_call.1} parent=1 // pred_check_branch
      %41 = sbr.rel (0) target = $region21
    $region20: #{tpu_custom_call.1} parent=1 // pred_region
      %42 = dma.done [#allocation7], 256
    $region21: #{tpu_custom_call.1} parent=1 // pred_fallthru
      _
    %p44 = scmp.eq.s32.totalorder 0, 0
    // Predicated region
    $region22: #{tpu_custom_call.1} parent=1 // pred_check
      %p45 = pneg %p44
    $region23: #{tpu_custom_call.1} parent=1 // pred_check_branch
      %47 = sbr.rel (%p45) target = $region25
    $region24: #{tpu_custom_call.1} parent=1 // pred_region
      %vm48 = vcmask 785408
      %49 = vst.msk [vmem:[#allocation2] sm:$0xff] %vm48, 0.0
      %50 = vst.msk [vmem:[#allocation2 + $0x8] sm:$0xff] %vm48, 0.0
    $region25: #{tpu_custom_call.1} parent=1 // pred_fallthru
      _
    %v51 = vld [vmem:[#allocation2] sm:$0xff]
    %v52 = vld [vmem:[#allocation2 + $0x8] sm:$0xff]
    %v53 = vld [vmem:[#allocation3] sm:$0xf]
    %v54 = vld [vmem:[#allocation3 + $0x4] sm:$0xf]
    %v55 = vld [vmem:[#allocation6] sm:$0xf]
    %v56 = vld [vmem:[#allocation6 + $0x4] sm:$0xf]
    %v57 = vld [vmem:[#allocation6 + $0x8] sm:$0xf]
    %v58 = vld [vmem:[#allocation6 + $0xc] sm:$0xf]
    %v61 = vunpack.c.l.b16 %v53
    %v62 = vunpack.c.l.b16 %v54
    %v63 = vpack.c.b16 %v62, %v61
    %v68 = vunpack.c.l.b16 %v55
    %v69 = vunpack.c.l.b16 %v56
    %v70 = vunpack.c.l.b16 %v57
    %v71 = vunpack.c.l.b16 %v58
    %v72 = vpack.c.b16 %v69, %v68
    %v73 = vpack.c.b16 %v71, %v70
    %vm76 = vcmask 261120
    %v78 = vsel %vm76, %v63, 0
    %80 = vmatprep.subr.bf16.mxu0 0
    %81 = vmatpush1.bf16.msra.mxu0 %v72
    %82 = vmatprep.subr.bf16.mxu0 0
    %83 = vmatpush1.bf16.msra.mxu0 %v73
    %84 = vmatprep.subr.bf16.mxu0 0
    %85 = vmatpush1.bf16.msra.mxu0 0
    %86 = vmatprep.subr.bf16.mxu0 0
    %87 = vmatpush1.bf16.msra.mxu0 0
    %88 = vmatprep.subr.bf16.mxu0 0
    %89 = vmatpush1.bf16.msra.mxu0 0
    %90 = vmatprep.subr.bf16.mxu0 0
    %91 = vmatpush1.bf16.msra.mxu0 0
    %92 = vmatprep.subr.bf16.mxu0 0
    %93 = vmatpush1.bf16.msra.mxu0 0
    %94 = vmatprep.subr.bf16.mxu0 0
    %95 = vmatpush1.bf16.msra.mxu0 0
    %96 = vmatprep.subr.bf16.mxu0 0
    %97 = vmatpush1.bf16.msra.mxu0 0
    %98 = vmatprep.subr.bf16.mxu0 0
    %99 = vmatpush1.bf16.msra.mxu0 0
    %100 = vmatprep.subr.bf16.mxu0 0
    %101 = vmatpush1.bf16.msra.mxu0 0
    %102 = vmatprep.subr.bf16.mxu0 0
    %103 = vmatpush1.bf16.msra.mxu0 0
    %104 = vmatprep.subr.bf16.mxu0 0
    %105 = vmatpush1.bf16.msra.mxu0 0
    %106 = vmatprep.subr.bf16.mxu0 0
    %107 = vmatpush1.bf16.msra.mxu0 0
    %108 = vmatprep.subr.bf16.mxu0 0
    %109 = vmatpush1.bf16.msra.mxu0 0
    %110 = vmatprep.subr.bf16.mxu0 0
    %111 = vmatpush1.bf16.msra.mxu0 0
    %112 = vmatprep.mubr.bf16.mxu0 0
    %113 = vmatmul.mubr.bf16.gmra.mrb[0].mxu0 %v78
    %v114 = vpop.f32.mrb[0].mxu0
    %v115 = vadd.f32 0.0, %v114
    %v116 = vpop.f32.mrb[0].mxu0
    %v117 = vpop.f32.mrb[0].mxu0
    %v118 = vadd.f32 0.0, %v117
    %v119 = vpop.f32.mrb[0].mxu0
    %120 = vdwg.mxu0
    %v121 = vadd.f32 %v51, %v115
    %v122 = vadd.f32 %v52, %v118
    %vm123 = vcmask 785408
    %124 = vst.msk [vmem:[#allocation2] sm:$0xff] %vm123, %v121
    %125 = vst.msk [vmem:[#allocation2 + $0x8] sm:$0xff] %vm123, %v122
    // Predicated region
    $region26: #{tpu_custom_call.1} parent=1 // pred_check
      %p126 = pneg %p44
    $region27: #{tpu_custom_call.1} parent=1 // pred_check_branch
      %128 = sbr.rel (%p126) target = $region29
    $region28: #{tpu_custom_call.1} parent=1 // pred_region
      %v129 = vld [vmem:[#allocation2] sm:$0xff]
      %v130 = vld [vmem:[#allocation2 + $0x8] sm:$0xff]
      %v131 = vld [vmem:[%s2] sm:$0x1]
      %v133 = vlaneseq
      %v134 = vshrl.u32 %v133, 7
      %v135 = vsub.s32 0, %v134
      %v136 = vrot.slane %v131, %v135
      %v138 = vadd.f32 %v129, %v136
      %v139 = vadd.f32 %v130, %v136
      %v140 = vpack.c.bf16 %v139, %v138
      %v142 = vunpack.c.l.b16 %v140
      %v143 = vunpack.c.h.b16 %v140
      %v144 = vpack.c.b16 %v142, %v142
      %v145 = vpack.c.b16 %v143, %v143
      %vm148 = vcmask 781312
      %149 = vst.msk [vmem:[#allocation8] sm:$0xf] %vm148, %v144
      %150 = vst.msk [vmem:[#allocation8 + $0x4] sm:$0xf] %vm148, %v145
    $region29: #{tpu_custom_call.1} parent=1 // pred_fallthru
      _
    // Predicated region
    $region30: #{tpu_custom_call.1} parent=1 // pred_check
      _
    $region31: #{tpu_custom_call.1} parent=1 // pred_check_branch
      %152 = sbr.rel (0) target = $region33
    $region32: #{tpu_custom_call.1} parent=1 // pred_region
      %s154 = ssub.s32 128, 128
      %155 = vsyncadd [#allocation5], %s154
      %s156 = sshll.u32 [#allocation8], 4
      %s157 = int_to_ptr.vmem [resolvable:$true] %s156
      %162 = dma.vmem_to_hbm [thread:$0]  %s157, 128, %s3, [#allocation5], 64, 64, 4
    $region33: #{tpu_custom_call.1} parent=1 // pred_fallthru
      _
    // Predicated region
    $region34: #{tpu_custom_call.1} parent=1 // pred_check
      _
    $region35: #{tpu_custom_call.1} parent=1 // pred_check_branch
      %164 = sbr.rel (0) target = $region37
    $region36: #{tpu_custom_call.1} parent=1 // pred_region
      %165 = dma.done [#allocation5], 128
    $region37: #{tpu_custom_call.1} parent=1 // pred_fallthru
      _
    %166 = vsyncpa [#allocation4], 1
    %167 = vsyncpa [#allocation7], 1
    %168 = vsyncpa [#allocation5], 1

</llo_original>
